<compile_context>
chip_gen: v5e
topology: v5e:2x2
jax: 0.10.0
libtpu: 0.0.40
codegen_flags: <defaults>
</compile_context>

<pallas_src>
import functools

import jax
import jax.numpy as jnp
from jax.experimental import pallas as pl
from jax.experimental.pallas import tpu as pltpu


# ----------------------------- Pallas kernel -------------------------------- #

def _full_spec(shape):
    # Single block covering the whole array, resident in VMEM.
    return pl.BlockSpec(shape, lambda: (0,) * len(shape),
                        memory_space=pltpu.MemorySpace.VMEM)


def _make_fused_mlp_kernel(n_layer: int, residual: bool):
    """Builds the fused kernel; n_layer / residual are static (loop unrolled)."""
    if residual:
        def kernel(x_ref, in_wt_ref, w1t_ref, b1_ref, wpt_ref, out_wt_ref, o_ref):
            # in_proj: h = x @ Win^T
            h = jnp.dot(x_ref[...], in_wt_ref[...],
                        preferred_element_type=jnp.float32)
            # Blocks: h = relu(h @ W1^T + b1) @ Wp^T + h   (f32 all the way)
            for l in range(n_layer):
                a = jnp.dot(h, w1t_ref[l], preferred_element_type=jnp.float32)
                a = jnp.maximum(a + b1_ref[l], 0.0)
                h = jnp.dot(a, wpt_ref[l], preferred_element_type=jnp.float32) + h
            # out_proj (lane-dense padded output): y = h @ Wout^T
            y = jnp.dot(h, out_wt_ref[...], preferred_element_type=jnp.float32)
            o_ref[...] = y.astype(o_ref.dtype)
        return kernel
    else:
        def kernel(x_ref, in_wt_ref, w1t_ref, b1_ref, out_wt_ref, o_ref):
            h = jnp.dot(x_ref[...], in_wt_ref[...],
                        preferred_element_type=jnp.float32)
            for l in range(n_layer):
                a = jnp.dot(h, w1t_ref[l], preferred_element_type=jnp.float32)
                h = jnp.maximum(a + b1_ref[l], 0.0)
            y = jnp.dot(h, out_wt_ref[...], preferred_element_type=jnp.float32)
            o_ref[...] = y.astype(o_ref.dtype)
        return kernel


def _fused_mlp_call(xp, in_wt, w1t, b1, wpt, out_wt, residual):
    """One pallas_call for the whole MLP.  xp: [B_pad, in_dim] (B_pad % 8 == 0)."""
    B_pad, in_dim = xp.shape
    n_layer, _, D = w1t.shape
    out_pad = out_wt.shape[1]

    kernel = _make_fused_mlp_kernel(n_layer, residual)

    in_specs = [
        _full_spec((B_pad, in_dim)),     # activations
        _full_spec((in_dim, D)),         # in_proj W^T
        _full_spec((n_layer, D, D)),     # stacked block linear W^T
        _full_spec((n_layer, 1, D)),     # stacked block biases
    ]
    args = [xp, in_wt, w1t, b1]
    if residual:
        in_specs.append(_full_spec((n_layer, D, D)))   # stacked block proj W^T
        args.append(wpt)
    in_specs.append(_full_spec((D, out_pad)))          # out_proj W^T (zero-padded)
    args.append(out_wt)

    return pl.pallas_call(
        kernel,
        out_shape=jax.ShapeDtypeStruct((B_pad, out_pad), xp.dtype),
        in_specs=in_specs,
        out_specs=_full_spec((B_pad, out_pad)),
    )(*args)


# --------------------------------- model ------------------------------------ #

def init_mlp_params(key, in_dim, hidden_dim, out_dim, n_layer, residual,
                    dtype=jnp.float32):
    """Generates PyTorch-layout weights, then pre-transposes/stacks/pads ONCE."""
    def _w(k, n, m):
        return 0.02 * jax.random.normal(k, (n, m), dtype)     # torch layout [out, in]

    key, k = jax.random.split(key)
    in_w = _w(k, hidden_dim, in_dim)

    w1s, b1s, wps = [], [], []
    for _ in range(n_layer):
        key, k1, k2, k3 = jax.random.split(key, 4)
        w1s.append(_w(k1, hidden_dim, hidden_dim))
        b1s.append(0.02 * jax.random.normal(k2, (hidden_dim,), dtype))
        if residual:
            wps.append(_w(k3, hidden_dim, hidden_dim))

    key, k = jax.random.split(key)
    out_w = _w(k, out_dim, hidden_dim)

    # Pad out_proj's output-feature axis to a lane-dense multiple of 128.
    out_pad = max(128, ((out_dim + 127) // 128) * 128)
    out_wt = jnp.zeros((hidden_dim, out_pad), dtype).at[:, :out_dim].set(out_w.T)

    return {
        "in_proj_wt": in_w.T,                                         # [in_dim, D]
        "blocks_w1t": jnp.stack([w.T for w in w1s]),                  # [L, D, D]
        "blocks_b1": jnp.stack(b1s).reshape(n_layer, 1, hidden_dim),  # [L, 1, D]
        "blocks_wpt": jnp.stack([w.T for w in wps]) if residual else None,
        "out_proj_wt": out_wt,                                        # [D, out_pad]
    }


@functools.partial(jax.jit, static_argnames=("residual", "out_dim"))
def mlp_forward(params, x, residual, out_dim):
    # nn.Flatten: [B, C, H, W] -> [B, C*H*W]
    B = x.shape[0]
    h = x.reshape(B, -1)
    # Pad the batch (sublane) dimension to a multiple of 8.
    B_pad = max(8, ((B + 7) // 8) * 8)
    hp = jnp.pad(h, ((0, B_pad - B), (0, 0)))
    yp = _fused_mlp_call(hp, params["in_proj_wt"], params["blocks_w1t"],
                         params["blocks_b1"], params["blocks_wpt"],
                         params["out_proj_wt"], residual)
    return yp[:B, :out_dim]


def mlp_reference(params, x, residual, out_dim):
    # Pure-JAX reference (same math on the pre-transposed params).
    B = x.shape[0]
    h = x.reshape(B, -1)
    h = h @ params["in_proj_wt"]
    n_layer = params["blocks_w1t"].shape[0]
    for l in range(n_layer):
        o = jnp.maximum(h @ params["blocks_w1t"][l] + params["blocks_b1"][l], 0.0)
        if residual:
            o = o @ params["blocks_wpt"][l] + h
        h = o
    return (h @ params["out_proj_wt"])[:, :out_dim]


# ---------------------------------- main ------------------------------------ #

if __name__ == "__main__":
    key = jax.random.PRNGKey(0)
    B, C, H, W = 2, 4, 16, 16          # input [2, 4, 16, 16] (NCHW)
    in_dim = C * H * W                 # 1024
    hidden_dim = 128
    out_dim = 32
    n_layer = 2
    residual = True

    key, kx, kp = jax.random.split(key, 3)
    x = jax.random.normal(kx, (B, C, H, W), jnp.float32)
    params = init_mlp_params(kp, in_dim, hidden_dim, out_dim, n_layer, residual)

    out = mlp_forward(params, x, residual, out_dim)
    out = jax.block_until_ready(out)

    ref = mlp_reference(params, x, residual, out_dim)
    assert out.shape == (B, out_dim), out.shape
    assert jnp.allclose(out, ref, atol=1e-4, rtol=1e-4), "mismatch vs reference"

    print("KERNEL_OK")
</pallas_src>

<mosaic_0001>
module attributes {stable_mosaic.version = 11 : i64} {
  func.func @kernel(%arg0: memref<8x1024xf32, #tpu.memory_space<vmem>>, %arg1: memref<1024x128xf32, #tpu.memory_space<vmem>>, %arg2: memref<2x128x128xf32, #tpu.memory_space<vmem>>, %arg3: memref<2x1x128xf32, #tpu.memory_space<vmem>>, %arg4: memref<2x128x128xf32, #tpu.memory_space<vmem>>, %arg5: memref<128x128xf32, #tpu.memory_space<vmem>>, %arg6: memref<8x128xf32, #tpu.memory_space<vmem>>) attributes {dimension_semantics = [], scalar_prefetch = 0 : i64, scratch_operands = 0 : i64, tpu.core_type = #tpu.core_type<tc>} {
    %c0 = arith.constant 0 : index
    %c0_0 = arith.constant 0 : index
    %0 = vector.load %arg0[%c0, %c0_0] : memref<8x1024xf32, #tpu.memory_space<vmem>>, vector<8x1024xf32>
    %c0_1 = arith.constant 0 : index
    %c0_2 = arith.constant 0 : index
    %1 = vector.load %arg1[%c0_1, %c0_2] : memref<1024x128xf32, #tpu.memory_space<vmem>>, vector<1024x128xf32>
    %cst = arith.constant dense<0.000000e+00> : vector<8x128xf32>
    %2 = tpu.matmul %0, %1, %cst {dimension_numbers = #tpu.dot_dimension_numbers<[1], [0], [0], [1], [0, 0, 1, 1], [], []>} : vector<8x1024xf32>, vector<1024x128xf32>, vector<8x128xf32> -> vector<8x128xf32>
    %c0_3 = arith.constant 0 : index
    %c0_4 = arith.constant 0 : index
    %c0_5 = arith.constant 0 : index
    %3 = vector.load %arg2[%c0_3, %c0_4, %c0_5] : memref<2x128x128xf32, #tpu.memory_space<vmem>>, vector<1x128x128xf32>
    %4 = vector.shape_cast %3 : vector<1x128x128xf32> to vector<128x128xf32>
    %cst_6 = arith.constant dense<0.000000e+00> : vector<8x128xf32>
    %5 = tpu.matmul %2, %4, %cst_6 {dimension_numbers = #tpu.dot_dimension_numbers<[1], [0], [0], [1], [0, 0, 1, 1], [], []>} : vector<8x128xf32>, vector<128x128xf32>, vector<8x128xf32> -> vector<8x128xf32>
    %c0_7 = arith.constant 0 : index
    %c0_8 = arith.constant 0 : index
    %c0_9 = arith.constant 0 : index
    %6 = vector.load %arg3[%c0_7, %c0_8, %c0_9] : memref<2x1x128xf32, #tpu.memory_space<vmem>>, vector<1x1x128xf32>
    %7 = vector.shape_cast %6 : vector<1x1x128xf32> to vector<1x128xf32>
    %8 = vector.broadcast %7 : vector<1x128xf32> to vector<8x128xf32>
    %9 = arith.addf %5, %8 : vector<8x128xf32>
    %cst_10 = arith.constant 0.000000e+00 : f32
    %10 = vector.broadcast %cst_10 : f32 to vector<8x128xf32>
    %11 = arith.maximumf %9, %10 : vector<8x128xf32>
    %c0_11 = arith.constant 0 : index
    %c0_12 = arith.constant 0 : index
    %c0_13 = arith.constant 0 : index
    %12 = vector.load %arg4[%c0_11, %c0_12, %c0_13] : memref<2x128x128xf32, #tpu.memory_space<vmem>>, vector<1x128x128xf32>
    %13 = vector.shape_cast %12 : vector<1x128x128xf32> to vector<128x128xf32>
    %cst_14 = arith.constant dense<0.000000e+00> : vector<8x128xf32>
    %14 = tpu.matmul %11, %13, %cst_14 {dimension_numbers = #tpu.dot_dimension_numbers<[1], [0], [0], [1], [0, 0, 1, 1], [], []>} : vector<8x128xf32>, vector<128x128xf32>, vector<8x128xf32> -> vector<8x128xf32>
    %15 = arith.addf %14, %2 : vector<8x128xf32>
    %c1 = arith.constant 1 : index
    %c0_15 = arith.constant 0 : index
    %c0_16 = arith.constant 0 : index
    %16 = vector.load %arg2[%c1, %c0_15, %c0_16] : memref<2x128x128xf32, #tpu.memory_space<vmem>>, vector<1x128x128xf32>
    %17 = vector.shape_cast %16 : vector<1x128x128xf32> to vector<128x128xf32>
    %cst_17 = arith.constant dense<0.000000e+00> : vector<8x128xf32>
    %18 = tpu.matmul %15, %17, %cst_17 {dimension_numbers = #tpu.dot_dimension_numbers<[1], [0], [0], [1], [0, 0, 1, 1], [], []>} : vector<8x128xf32>, vector<128x128xf32>, vector<8x128xf32> -> vector<8x128xf32>
    %c1_18 = arith.constant 1 : index
    %c0_19 = arith.constant 0 : index
    %c0_20 = arith.constant 0 : index
    %19 = vector.load %arg3[%c1_18, %c0_19, %c0_20] : memref<2x1x128xf32, #tpu.memory_space<vmem>>, vector<1x1x128xf32>
    %20 = vector.shape_cast %19 : vector<1x1x128xf32> to vector<1x128xf32>
    %21 = vector.broadcast %20 : vector<1x128xf32> to vector<8x128xf32>
    %22 = arith.addf %18, %21 : vector<8x128xf32>
    %cst_21 = arith.constant 0.000000e+00 : f32
    %23 = vector.broadcast %cst_21 : f32 to vector<8x128xf32>
    %24 = arith.maximumf %22, %23 : vector<8x128xf32>
    %c1_22 = arith.constant 1 : index
    %c0_23 = arith.constant 0 : index
    %c0_24 = arith.constant 0 : index
    %25 = vector.load %arg4[%c1_22, %c0_23, %c0_24] : memref<2x128x128xf32, #tpu.memory_space<vmem>>, vector<1x128x128xf32>
    %26 = vector.shape_cast %25 : vector<1x128x128xf32> to vector<128x128xf32>
    %cst_25 = arith.constant dense<0.000000e+00> : vector<8x128xf32>
    %27 = tpu.matmul %24, %26, %cst_25 {dimension_numbers = #tpu.dot_dimension_numbers<[1], [0], [0], [1], [0, 0, 1, 1], [], []>} : vector<8x128xf32>, vector<128x128xf32>, vector<8x128xf32> -> vector<8x128xf32>
    %28 = arith.addf %27, %15 : vector<8x128xf32>
    %c0_26 = arith.constant 0 : index
    %c0_27 = arith.constant 0 : index
    %29 = vector.load %arg5[%c0_26, %c0_27] : memref<128x128xf32, #tpu.memory_space<vmem>>, vector<128x128xf32>
    %cst_28 = arith.constant dense<0.000000e+00> : vector<8x128xf32>
    %30 = tpu.matmul %28, %29, %cst_28 {dimension_numbers = #tpu.dot_dimension_numbers<[1], [0], [0], [1], [0, 0, 1, 1], [], []>} : vector<8x128xf32>, vector<128x128xf32>, vector<8x128xf32> -> vector<8x128xf32>
    %c0_29 = arith.constant 0 : index
    %c0_30 = arith.constant 0 : index
    %31 = vector.load %arg6[%c0_29, %c0_30] : memref<8x128xf32, #tpu.memory_space<vmem>>, vector<8x128xf32>
    tpu.vector_store %arg6[%c0_29, %c0_30], %30 {strides = array<i32>} : memref<8x128xf32, #tpu.memory_space<vmem>>, vector<8x128xf32>,
    return
  }
}

</mosaic_0001>

<llo_original>
// kernel: mlp_forward.1
$region0: #{mlp_forward.1}
  #allocation0 [shape = 'u32[]', space=smem, size = 0x4, offset = 0x4, fixed_abs, tag = 'smem constant byte address 0x4 - core index']
  #allocation1 [shape = 'u32[72,128]{1,0:T(1,128)}', space=vmem, size = 0x9000, scoped, tag = 'internal scratch']
  %s0 = inlined_call_operand.vmem [shape: f32[8,1024], index: 0, kind: input, shape index: {}]
  %s1 = inlined_call_operand.hbm [shape: f32[1024,128], index: 1, kind: input, shape index: {}]
  %s2 = inlined_call_operand.hbm [shape: f32[2,128,128], index: 2, kind: input, shape index: {}]
  %s3 = inlined_call_operand.vmem [shape: f32[2,1,128], index: 3, kind: input, shape index: {}]
  %s4 = inlined_call_operand.hbm [shape: f32[2,128,128], index: 4, kind: input, shape index: {}]
  %s5 = inlined_call_operand.vmem [shape: f32[128,128], index: 5, kind: input, shape index: {}]
  %s6 = inlined_call_operand.vmem [shape: f32[8,128], index: 6, kind: output, shape index: {}]
  %s7 = sld [smem:[#allocation0]]
  $region46: #{mlp_forward.1} parent=0
    _
  %s9 = ssub.s32 1, %s7
  %s10 = scalar_select 0, %s9, %s7
  $region1: #{mlp_forward.1} parent=0
    #allocation2 [shape = 'u8[524288]{0}', space=vmem, size = 0x80000, scoped, tag = 'input window, operand 1, single buffered']
    #allocation3 [shape = 's32[1]{0}', space=sflag, size = 0x4, scoped, tag = 'scoped memory for mlp_forward.1']
    #allocation4 [shape = 'u8[131072]{0}', space=vmem, size = 0x20000, scoped, tag = 'input window, operand 2, single buffered']
    #allocation5 [shape = 's32[1]{0}', space=sflag, size = 0x4, scoped, tag = 'scoped memory for mlp_forward.1']
    #allocation6 [shape = 'u8[131072]{0}', space=vmem, size = 0x20000, scoped, tag = 'input window, operand 4, single buffered']
    %11 = vsyncpa [#allocation3], 0
    %12 = vsyncpa [#allocation5], 0
    // Predicated region
    $region2: #{mlp_forward.1} parent=1 // pred_check
      _
    $region3: #{mlp_forward.1} parent=1 // pred_check_branch
      %14 = sbr.rel (0) target = $region5
    $region4: #{mlp_forward.1} parent=1 // pred_region
      _
    $region5: #{mlp_forward.1} parent=1 // pred_fallthru
      _
    // Predicated region
    $region6: #{mlp_forward.1} parent=1 // pred_check
      _
    $region7: #{mlp_forward.1} parent=1 // pred_check_branch
      %16 = sbr.rel (0) target = $region9
    $region8: #{mlp_forward.1} parent=1 // pred_region
      %18 = vsyncadd [#allocation3], 0
      %s19 = sshll.u32 %s1, 4
      %s20 = int_to_ptr.hbm [resolvable:$true] %s19
      %s21 = sshll.u32 [#allocation2], 4
      %s22 = int_to_ptr.vmem [resolvable:$true] %s21
      %27 = dma.hbm_to_vmem [thread:$0]  %s20, 16384, %s22, [#allocation3], 128, 128, 8
    $region9: #{mlp_forward.1} parent=1 // pred_fallthru
      _
    // Predicated region
    $region10: #{mlp_forward.1} parent=1 // pred_check
      _
    $region11: #{mlp_forward.1} parent=1 // pred_check_branch
      %29 = sbr.rel (0) target = $region13
    $region12: #{mlp_forward.1} parent=1 // pred_region
      %31 = vsyncadd [#allocation5], 0
      %s32 = sshll.u32 %s2, 4
      %s33 = int_to_ptr.hbm [resolvable:$true] %s32
      %s34 = sshll.u32 [#allocation4], 4
      %s35 = int_to_ptr.vmem [resolvable:$true] %s34
      %40 = dma.hbm_to_vmem [thread:$0]  %s33, 4096, %s35, [#allocation5], 128, 128, 8
    $region13: #{mlp_forward.1} parent=1 // pred_fallthru
      _
    // Predicated region
    $region14: #{mlp_forward.1} parent=1 // pred_check
      _
    $region15: #{mlp_forward.1} parent=1 // pred_check_branch
      %42 = sbr.rel (0) target = $region17
    $region16: #{mlp_forward.1} parent=1 // pred_region
      _
    $region17: #{mlp_forward.1} parent=1 // pred_fallthru
      _
    // Predicated region
    $region18: #{mlp_forward.1} parent=1 // pred_check
      _
    $region19: #{mlp_forward.1} parent=1 // pred_check_branch
      %44 = sbr.rel (0) target = $region21
    $region20: #{mlp_forward.1} parent=1 // pred_region
      %46 = vsyncadd [#allocation5], 0
      %s47 = sshll.u32 %s4, 4
      %s48 = int_to_ptr.hbm [resolvable:$true] %s47
      %s49 = sshll.u32 [#allocation6], 4
      %s50 = int_to_ptr.vmem [resolvable:$true] %s49
      %55 = dma.hbm_to_vmem [thread:$0]  %s48, 4096, %s50, [#allocation5], 128, 128, 8
    $region21: #{mlp_forward.1} parent=1 // pred_fallthru
      _
    // Predicated region
    $region22: #{mlp_forward.1} parent=1 // pred_check
      _
    $region23: #{mlp_forward.1} parent=1 // pred_check_branch
      %57 = sbr.rel (0) target = $region25
    $region24: #{mlp_forward.1} parent=1 // pred_region
      _
    $region25: #{mlp_forward.1} parent=1 // pred_fallthru
      _
    // Predicated region
    $region26: #{mlp_forward.1} parent=1 // pred_check
      _
    $region27: #{mlp_forward.1} parent=1 // pred_check_branch
      %59 = sbr.rel (0) target = $region29
    $region28: #{mlp_forward.1} parent=1 // pred_region
      %61 = dma.done [#allocation3], 16384
    $region29: #{mlp_forward.1} parent=1 // pred_fallthru
      _
    // Predicated region
    $region30: #{mlp_forward.1} parent=1 // pred_check
      _
    $region31: #{mlp_forward.1} parent=1 // pred_check_branch
      %63 = sbr.rel (0) target = $region33
    $region32: #{mlp_forward.1} parent=1 // pred_region
      %65 = dma.done [#allocation5], 4096
    $region33: #{mlp_forward.1} parent=1 // pred_fallthru
      _
    // Predicated region
    $region34: #{mlp_forward.1} parent=1 // pred_check
      _
    $region35: #{mlp_forward.1} parent=1 // pred_check_branch
      %67 = sbr.rel (0) target = $region37
    $region36: #{mlp_forward.1} parent=1 // pred_region
      %69 = dma.done [#allocation5], 4096
    $region37: #{mlp_forward.1} parent=1 // pred_fallthru
      _
    %v70 = vld [vmem:[%s0] sm:$0xff]
    %v71 = vld [vmem:[%s0 + $0x8] sm:$0xff]
    %v72 = vld [vmem:[%s0 + $0x10] sm:$0xff]
    %v73 = vld [vmem:[%s0 + $0x18] sm:$0xff]
    %v74 = vld [vmem:[%s0 + $0x20] sm:$0xff]
    %v75 = vld [vmem:[%s0 + $0x28] sm:$0xff]
    %v76 = vld [vmem:[%s0 + $0x30] sm:$0xff]
    %v77 = vld [vmem:[%s0 + $0x38] sm:$0xff]
    %v78 = vld [vmem:[#allocation2] sm:$0xff]
    %v79 = vld [vmem:[#allocation2 + $0x8] sm:$0xff]
    %v80 = vld [vmem:[#allocation2 + $0x10] sm:$0xff]
    %v81 = vld [vmem:[#allocation2 + $0x18] sm:$0xff]
    %v82 = vld [vmem:[#allocation2 + $0x20] sm:$0xff]
    %v83 = vld [vmem:[#allocation2 + $0x28] sm:$0xff]
    %v84 = vld [vmem:[#allocation2 + $0x30] sm:$0xff]
    %v85 = vld [vmem:[#allocation2 + $0x38] sm:$0xff]
    %v86 = vld [vmem:[#allocation2 + $0x40] sm:$0xff]
    %v87 = vld [vmem:[#allocation2 + $0x48] sm:$0xff]
    %v88 = vld [vmem:[#allocation2 + $0x50] sm:$0xff]
    %v89 = vld [vmem:[#allocation2 + $0x58] sm:$0xff]
    %v90 = vld [vmem:[#allocation2 + $0x60] sm:$0xff]
    %v91 = vld [vmem:[#allocation2 + $0x68] sm:$0xff]
    %v92 = vld [vmem:[#allocation2 + $0x70] sm:$0xff]
    %v93 = vld [vmem:[#allocation2 + $0x78] sm:$0xff]
    %v94 = vld [vmem:[#allocation2 + $0x80] sm:$0xff]
    %v95 = vld [vmem:[#allocation2 + $0x88] sm:$0xff]
    %v96 = vld [vmem:[#allocation2 + $0x90] sm:$0xff]
    %v97 = vld [vmem:[#allocation2 + $0x98] sm:$0xff]
    %v98 = vld [vmem:[#allocation2 + $0xa0] sm:$0xff]
    %v99 = vld [vmem:[#allocation2 + $0xa8] sm:$0xff]
    %v100 = vld [vmem:[#allocation2 + $0xb0] sm:$0xff]
    %v101 = vld [vmem:[#allocation2 + $0xb8] sm:$0xff]
    %v102 = vld [vmem:[#allocation2 + $0xc0] sm:$0xff]
    %v103 = vld [vmem:[#allocation2 + $0xc8] sm:$0xff]
    %v104 = vld [vmem:[#allocation2 + $0xd0] sm:$0xff]
    %v105 = vld [vmem:[#allocation2 + $0xd8] sm:$0xff]
    %v106 = vld [vmem:[#allocation2 + $0xe0] sm:$0xff]
    %v107 = vld [vmem:[#allocation2 + $0xe8] sm:$0xff]
    %v108 = vld [vmem:[#allocation2 + $0xf0] sm:$0xff]
    %v109 = vld [vmem:[#allocation2 + $0xf8] sm:$0xff]
    %v110 = vld [vmem:[#allocation2 + $0x100] sm:$0xff]
    %v111 = vld [vmem:[#allocation2 + $0x108] sm:$0xff]
    %v112 = vld [vmem:[#allocation2 + $0x110] sm:$0xff]
    %v113 = vld [vmem:[#allocation2 + $0x118] sm:$0xff]
    %v114 = vld [vmem:[#allocation2 + $0x120] sm:$0xff]
    %v115 = vld [vmem:[#allocation2 + $0x128] sm:$0xff]
    %v116 = vld [vmem:[#allocation2 + $0x130] sm:$0xff]
    %v117 = vld [vmem:[#allocation2 + $0x138] sm:$0xff]
    %v118 = vld [vmem:[#allocation2 + $0x140] sm:$0xff]
    %v119 = vld [vmem:[#allocation2 + $0x148] sm:$0xff]
    %v120 = vld [vmem:[#allocation2 + $0x150] sm:$0xff]
    %v121 = vld [vmem:[#allocation2 + $0x158] sm:$0xff]
    %v122 = vld [vmem:[#allocation2 + $0x160] sm:$0xff]
    %v123 = vld [vmem:[#allocation2 + $0x168] sm:$0xff]
    %v124 = vld [vmem:[#allocation2 + $0x170] sm:$0xff]
    %v125 = vld [vmem:[#allocation2 + $0x178] sm:$0xff]
    %v126 = vld [vmem:[#allocation2 + $0x180] sm:$0xff]
    %v127 = vld [vmem:[#allocation2 + $0x188] sm:$0xff]
    %v128 = vld [vmem:[#allocation2 + $0x190] sm:$0xff]
    %v129 = vld [vmem:[#allocation2 + $0x198] sm:$0xff]
    %v130 = vld [vmem:[#allocation2 + $0x1a0] sm:$0xff]
    %v131 = vld [vmem:[#allocation2 + $0x1a8] sm:$0xff]
    %v132 = vld [vmem:[#allocation2 + $0x1b0] sm:$0xff]
    %v133 = vld [vmem:[#allocation2 + $0x1b8] sm:$0xff]
    %v134 = vld [vmem:[#allocation2 + $0x1c0] sm:$0xff]
    %v135 = vld [vmem:[#allocation2 + $0x1c8] sm:$0xff]
    %v136 = vld [vmem:[#allocation2 + $0x1d0] sm:$0xff]
    %v137 = vld [vmem:[#allocation2 + $0x1d8] sm:$0xff]
    %v138 = vld [vmem:[#allocation2 + $0x1e0] sm:$0xff]
    %v139 = vld [vmem:[#allocation2 + $0x1e8] sm:$0xff]
    %v140 = vld [vmem:[#allocation2 + $0x1f0] sm:$0xff]
    %v141 = vld [vmem:[#allocation2 + $0x1f8] sm:$0xff]
    %v142 = vld [vmem:[#allocation2 + $0x200] sm:$0xff]
    %v143 = vld [vmem:[#allocation2 + $0x208] sm:$0xff]
    %v144 = vld [vmem:[#allocation2 + $0x210] sm:$0xff]
    %v145 = vld [vmem:[#allocation2 + $0x218] sm:$0xff]
    %v146 = vld [vmem:[#allocation2 + $0x220] sm:$0xff]
    %v147 = vld [vmem:[#allocation2 + $0x228] sm:$0xff]
    %v148 = vld [vmem:[#allocation2 + $0x230] sm:$0xff]
    %v149 = vld [vmem:[#allocation2 + $0x238] sm:$0xff]
    %v150 = vld [vmem:[#allocation2 + $0x240] sm:$0xff]
    %v151 = vld [vmem:[#allocation2 + $0x248] sm:$0xff]
    %v152 = vld [vmem:[#allocation2 + $0x250] sm:$0xff]
    %v153 = vld [vmem:[#allocation2 + $0x258] sm:$0xff]
    %v154 = vld [vmem:[#allocation2 + $0x260] sm:$0xff]
    %v155 = vld [vmem:[#allocation2 + $0x268] sm:$0xff]
    %v156 = vld [vmem:[#allocation2 + $0x270] sm:$0xff]
    %v157 = vld [vmem:[#allocation2 + $0x278] sm:$0xff]
    %v158 = vld [vmem:[#allocation2 + $0x280] sm:$0xff]
    %v159 = vld [vmem:[#allocation2 + $0x288] sm:$0xff]
    %v160 = vld [vmem:[#allocation2 + $0x290] sm:$0xff]
    %v161 = vld [vmem:[#allocation2 + $0x298] sm:$0xff]
    %v162 = vld [vmem:[#allocation2 + $0x2a0] sm:$0xff]
    %v163 = vld [vmem:[#allocation2 + $0x2a8] sm:$0xff]
    %v164 = vld [vmem:[#allocation2 + $0x2b0] sm:$0xff]
    %v165 = vld [vmem:[#allocation2 + $0x2b8] sm:$0xff]
    %v166 = vld [vmem:[#allocation2 + $0x2c0] sm:$0xff]
    %v167 = vld [vmem:[#allocation2 + $0x2c8] sm:$0xff]
    %v168 = vld [vmem:[#allocation2 + $0x2d0] sm:$0xff]
    %v169 = vld [vmem:[#allocation2 + $0x2d8] sm:$0xff]
    %v170 = vld [vmem:[#allocation2 + $0x2e0] sm:$0xff]
    %v171 = vld [vmem:[#allocation2 + $0x2e8] sm:$0xff]
    %v172 = vld [vmem:[#allocation2 + $0x2f0] sm:$0xff]
    %v173 = vld [vmem:[#allocation2 + $0x2f8] sm:$0xff]
    %v174 = vld [vmem:[#allocation2 + $0x300] sm:$0xff]
    %v175 = vld [vmem:[#allocation2 + $0x308] sm:$0xff]
    %v176 = vld [vmem:[#allocation2 + $0x310] sm:$0xff]
    %v177 = vld [vmem:[#allocation2 + $0x318] sm:$0xff]
    %v178 = vld [vmem:[#allocation2 + $0x320] sm:$0xff]
    %v179 = vld [vmem:[#allocation2 + $0x328] sm:$0xff]
    %v180 = vld [vmem:[#allocation2 + $0x330] sm:$0xff]
    %v181 = vld [vmem:[#allocation2 + $0x338] sm:$0xff]
    %v182 = vld [vmem:[#allocation2 + $0x340] sm:$0xff]
    %v183 = vld [vmem:[#allocation2 + $0x348] sm:$0xff]
    %v184 = vld [vmem:[#allocation2 + $0x350] sm:$0xff]
    %v185 = vld [vmem:[#allocation2 + $0x358] sm:$0xff]
    %v186 = vld [vmem:[#allocation2 + $0x360] sm:$0xff]
    %v187 = vld [vmem:[#allocation2 + $0x368] sm:$0xff]
    %v188 = vld [vmem:[#allocation2 + $0x370] sm:$0xff]
    %v189 = vld [vmem:[#allocation2 + $0x378] sm:$0xff]
    %v190 = vld [vmem:[#allocation2 + $0x380] sm:$0xff]
    %v191 = vld [vmem:[#allocation2 + $0x388] sm:$0xff]
    %v192 = vld [vmem:[#allocation2 + $0x390] sm:$0xff]
    %v193 = vld [vmem:[#allocation2 + $0x398] sm:$0xff]
    %v194 = vld [vmem:[#allocation2 + $0x3a0] sm:$0xff]
    %v195 = vld [vmem:[#allocation2 + $0x3a8] sm:$0xff]
    %v196 = vld [vmem:[#allocation2 + $0x3b0] sm:$0xff]
    %v197 = vld [vmem:[#allocation2 + $0x3b8] sm:$0xff]
    %v198 = vld [vmem:[#allocation2 + $0x3c0] sm:$0xff]
    %v199 = vld [vmem:[#allocation2 + $0x3c8] sm:$0xff]
    %v200 = vld [vmem:[#allocation2 + $0x3d0] sm:$0xff]
    %v201 = vld [vmem:[#allocation2 + $0x3d8] sm:$0xff]
    %v202 = vld [vmem:[#allocation2 + $0x3e0] sm:$0xff]
    %v203 = vld [vmem:[#allocation2 + $0x3e8] sm:$0xff]
    %v204 = vld [vmem:[#allocation2 + $0x3f0] sm:$0xff]
    %v205 = vld [vmem:[#allocation2 + $0x3f8] sm:$0xff]
    %206 = vmatpush.msra.mxu0 %v93
    %207 = vmatpush.msra.mxu0 %v92
    %208 = vmatpush.msra.mxu0 %v91
    %209 = vmatpush.msra.mxu0 %v90
    %210 = vmatpush.msra.mxu0 %v89
    %211 = vmatpush.msra.mxu0 %v88
    %212 = vmatpush.msra.mxu0 %v87
    %213 = vmatpush.msra.mxu0 %v86
    %214 = vmatpush.msra.mxu0 %v85
    %215 = vmatpush.msra.mxu0 %v84
    %216 = vmatpush.msra.mxu0 %v83
    %217 = vmatpush.msra.mxu0 %v82
    %218 = vmatpush.msra.mxu0 %v81
    %219 = vmatpush.msra.mxu0 %v80
    %220 = vmatpush.msra.mxu0 %v79
    %221 = vmatpush.msra.mxu0 %v78
    %222 = vmatmul.f32.gmra.mxu0 %v70
    %v223 = vpop.f32.mrf.mxu0
    %v224 = vadd.f32 0.0, %v223
    %225 = vdwg.mxu0
    %226 = vmatpush.msra.mxu0 %v109
    %227 = vmatpush.msra.mxu0 %v108
    %228 = vmatpush.msra.mxu0 %v107
    %229 = vmatpush.msra.mxu0 %v106
    %230 = vmatpush.msra.mxu0 %v105
    %231 = vmatpush.msra.mxu0 %v104
    %232 = vmatpush.msra.mxu0 %v103
    %233 = vmatpush.msra.mxu0 %v102
    %234 = vmatpush.msra.mxu0 %v101
    %235 = vmatpush.msra.mxu0 %v100
    %236 = vmatpush.msra.mxu0 %v99
    %237 = vmatpush.msra.mxu0 %v98
    %238 = vmatpush.msra.mxu0 %v97
    %239 = vmatpush.msra.mxu0 %v96
    %240 = vmatpush.msra.mxu0 %v95
    %241 = vmatpush.msra.mxu0 %v94
    %242 = vmatmul.f32.gmra.mxu0 %v71
    %v243 = vpop.f32.mrf.mxu0
    %v244 = vadd.f32 %v224, %v243
    %245 = vdwg.mxu0
    %246 = vmatpush.msra.mxu0 %v125
    %247 = vmatpush.msra.mxu0 %v124
    %248 = vmatpush.msra.mxu0 %v123
    %249 = vmatpush.msra.mxu0 %v122
    %250 = vmatpush.msra.mxu0 %v121
    %251 = vmatpush.msra.mxu0 %v120
    %252 = vmatpush.msra.mxu0 %v119
    %253 = vmatpush.msra.mxu0 %v118
    %254 = vmatpush.msra.mxu0 %v117
    %255 = vmatpush.msra.mxu0 %v116
    %256 = vmatpush.msra.mxu0 %v115
    %257 = vmatpush.msra.mxu0 %v114
    %258 = vmatpush.msra.mxu0 %v113
    %259 = vmatpush.msra.mxu0 %v112
    %260 = vmatpush.msra.mxu0 %v111
    %261 = vmatpush.msra.mxu0 %v110
    %262 = vmatmul.f32.gmra.mxu0 %v72
    %v263 = vpop.f32.mrf.mxu0
    %v264 = vadd.f32 %v244, %v263
    %265 = vdwg.mxu0
    %266 = vmatpush.msra.mxu0 %v141
    %267 = vmatpush.msra.mxu0 %v140
    %268 = vmatpush.msra.mxu0 %v139
    %269 = vmatpush.msra.mxu0 %v138
    %270 = vmatpush.msra.mxu0 %v137
    %271 = vmatpush.msra.mxu0 %v136
    %272 = vmatpush.msra.mxu0 %v135
    %273 = vmatpush.msra.mxu0 %v134
    %274 = vmatpush.msra.mxu0 %v133
    %275 = vmatpush.msra.mxu0 %v132
    %276 = vmatpush.msra.mxu0 %v131
    %277 = vmatpush.msra.mxu0 %v130
    %278 = vmatpush.msra.mxu0 %v129
    %279 = vmatpush.msra.mxu0 %v128
    %280 = vmatpush.msra.mxu0 %v127
    %281 = vmatpush.msra.mxu0 %v126
    %282 = vmatmul.f32.gmra.mxu0 %v73
    %v283 = vpop.f32.mrf.mxu0
    %v284 = vadd.f32 %v264, %v283
    %285 = vdwg.mxu0
    %286 = vmatpush.msra.mxu0 %v157
    %287 = vmatpush.msra.mxu0 %v156
    %288 = vmatpush.msra.mxu0 %v155
    %289 = vmatpush.msra.mxu0 %v154
    %290 = vmatpush.msra.mxu0 %v153
    %291 = vmatpush.msra.mxu0 %v152
    %292 = vmatpush.msra.mxu0 %v151
    %293 = vmatpush.msra.mxu0 %v150
    %294 = vmatpush.msra.mxu0 %v149
    %295 = vmatpush.msra.mxu0 %v148
    %296 = vmatpush.msra.mxu0 %v147
    %297 = vmatpush.msra.mxu0 %v146
    %298 = vmatpush.msra.mxu0 %v145
    %299 = vmatpush.msra.mxu0 %v144
    %300 = vmatpush.msra.mxu0 %v143
    %301 = vmatpush.msra.mxu0 %v142
    %302 = vmatmul.f32.gmra.mxu0 %v74
    %v303 = vpop.f32.mrf.mxu0
    %v304 = vadd.f32 %v284, %v303
    %305 = vdwg.mxu0
    %306 = vmatpush.msra.mxu0 %v173
    %307 = vmatpush.msra.mxu0 %v172
    %308 = vmatpush.msra.mxu0 %v171
    %309 = vmatpush.msra.mxu0 %v170
    %310 = vmatpush.msra.mxu0 %v169
    %311 = vmatpush.msra.mxu0 %v168
    %312 = vmatpush.msra.mxu0 %v167
    %313 = vmatpush.msra.mxu0 %v166
    %314 = vmatpush.msra.mxu0 %v165
    %315 = vmatpush.msra.mxu0 %v164
    %316 = vmatpush.msra.mxu0 %v163
    %317 = vmatpush.msra.mxu0 %v162
    %318 = vmatpush.msra.mxu0 %v161
    %319 = vmatpush.msra.mxu0 %v160
    %320 = vmatpush.msra.mxu0 %v159
    %321 = vmatpush.msra.mxu0 %v158
    %322 = vmatmul.f32.gmra.mxu0 %v75
    %v323 = vpop.f32.mrf.mxu0
    %v324 = vadd.f32 %v304, %v323
    %325 = vdwg.mxu0
    %326 = vmatpush.msra.mxu0 %v189
    %327 = vmatpush.msra.mxu0 %v188
    %328 = vmatpush.msra.mxu0 %v187
    %329 = vmatpush.msra.mxu0 %v186
    %330 = vmatpush.msra.mxu0 %v185
    %331 = vmatpush.msra.mxu0 %v184
    %332 = vmatpush.msra.mxu0 %v183
    %333 = vmatpush.msra.mxu0 %v182
    %334 = vmatpush.msra.mxu0 %v181
    %335 = vmatpush.msra.mxu0 %v180
    %336 = vmatpush.msra.mxu0 %v179
    %337 = vmatpush.msra.mxu0 %v178
    %338 = vmatpush.msra.mxu0 %v177
    %339 = vmatpush.msra.mxu0 %v176
    %340 = vmatpush.msra.mxu0 %v175
    %341 = vmatpush.msra.mxu0 %v174
    %342 = vmatmul.f32.gmra.mxu0 %v76
    %v343 = vpop.f32.mrf.mxu0
    %v344 = vadd.f32 %v324, %v343
    %345 = vdwg.mxu0
    %346 = vmatpush.msra.mxu0 %v205
    %347 = vmatpush.msra.mxu0 %v204
    %348 = vmatpush.msra.mxu0 %v203
    %349 = vmatpush.msra.mxu0 %v202
    %350 = vmatpush.msra.mxu0 %v201
    %351 = vmatpush.msra.mxu0 %v200
    %352 = vmatpush.msra.mxu0 %v199
    %353 = vmatpush.msra.mxu0 %v198
    %354 = vmatpush.msra.mxu0 %v197
    %355 = vmatpush.msra.mxu0 %v196
    %356 = vmatpush.msra.mxu0 %v195
    %357 = vmatpush.msra.mxu0 %v194
    %358 = vmatpush.msra.mxu0 %v193
    %359 = vmatpush.msra.mxu0 %v192
    %360 = vmatpush.msra.mxu0 %v191
    %361 = vmatpush.msra.mxu0 %v190
    %362 = vmatmul.f32.gmra.mxu0 %v77
    %v363 = vpop.f32.mrf.mxu0
    %v364 = vadd.f32 %v344, %v363
    %365 = vdwg.mxu0
    %v366 = vld [vmem:[#allocation4] sm:$0xff]
    %v367 = vld [vmem:[#allocation4 + $0x8] sm:$0xff]
    %v368 = vld [vmem:[#allocation4 + $0x10] sm:$0xff]
    %v369 = vld [vmem:[#allocation4 + $0x18] sm:$0xff]
    %v370 = vld [vmem:[#allocation4 + $0x20] sm:$0xff]
    %v371 = vld [vmem:[#allocation4 + $0x28] sm:$0xff]
    %v372 = vld [vmem:[#allocation4 + $0x30] sm:$0xff]
    %v373 = vld [vmem:[#allocation4 + $0x38] sm:$0xff]
    %v374 = vld [vmem:[#allocation4 + $0x40] sm:$0xff]
    %v375 = vld [vmem:[#allocation4 + $0x48] sm:$0xff]
    %v376 = vld [vmem:[#allocation4 + $0x50] sm:$0xff]
    %v377 = vld [vmem:[#allocation4 + $0x58] sm:$0xff]
    %v378 = vld [vmem:[#allocation4 + $0x60] sm:$0xff]
    %v379 = vld [vmem:[#allocation4 + $0x68] sm:$0xff]
    %v380 = vld [vmem:[#allocation4 + $0x70] sm:$0xff]
    %v381 = vld [vmem:[#allocation4 + $0x78] sm:$0xff]
    %v382 = vld [vmem:[%s3] sm:$0x1]
    %v384 = vperm.slane %v382, 0
    %386 = vmatpush.msra.mxu0 %v381
    %387 = vmatpush.msra.mxu0 %v380
    %388 = vmatpush.msra.mxu0 %v379
    %389 = vmatpush.msra.mxu0 %v378
    %390 = vmatpush.msra.mxu0 %v377
    %391 = vmatpush.msra.mxu0 %v376
    %392 = vmatpush.msra.mxu0 %v375
    %393 = vmatpush.msra.mxu0 %v374
    %394 = vmatpush.msra.mxu0 %v373
    %395 = vmatpush.msra.mxu0 %v372
    %396 = vmatpush.msra.mxu0 %v371
    %397 = vmatpush.msra.mxu0 %v370
    %398 = vmatpush.msra.mxu0 %v369
    %399 = vmatpush.msra.mxu0 %v368
    %400 = vmatpush.msra.mxu0 %v367
    %401 = vmatpush.msra.mxu0 %v366
    %402 = vmatmul.f32.gmra.mxu0 %v364
    %v403 = vpop.f32.mrf.mxu0
    %v404 = vadd.f32 %v384, %v403
    %405 = vdwg.mxu0
    %v406 = vmax.f32 %v404, 0.0
    %v407 = vld [vmem:[#allocation6] sm:$0xff]
    %v408 = vld [vmem:[#allocation6 + $0x8] sm:$0xff]
    %v409 = vld [vmem:[#allocation6 + $0x10] sm:$0xff]
    %v410 = vld [vmem:[#allocation6 + $0x18] sm:$0xff]
    %v411 = vld [vmem:[#allocation6 + $0x20] sm:$0xff]
    %v412 = vld [vmem:[#allocation6 + $0x28] sm:$0xff]
    %v413 = vld [vmem:[#allocation6 + $0x30] sm:$0xff]
    %v414 = vld [vmem:[#allocation6 + $0x38] sm:$0xff]
    %v415 = vld [vmem:[#allocation6 + $0x40] sm:$0xff]
    %v416 = vld [vmem:[#allocation6 + $0x48] sm:$0xff]
    %v417 = vld [vmem:[#allocation6 + $0x50] sm:$0xff]
    %v418 = vld [vmem:[#allocation6 + $0x58] sm:$0xff]
    %v419 = vld [vmem:[#allocation6 + $0x60] sm:$0xff]
    %v420 = vld [vmem:[#allocation6 + $0x68] sm:$0xff]
    %v421 = vld [vmem:[#allocation6 + $0x70] sm:$0xff]
    %v422 = vld [vmem:[#allocation6 + $0x78] sm:$0xff]
    %423 = vmatpush.msra.mxu0 %v422
    %424 = vmatpush.msra.mxu0 %v421
    %425 = vmatpush.msra.mxu0 %v420
    %426 = vmatpush.msra.mxu0 %v419
    %427 = vmatpush.msra.mxu0 %v418
    %428 = vmatpush.msra.mxu0 %v417
    %429 = vmatpush.msra.mxu0 %v416
    %430 = vmatpush.msra.mxu0 %v415
    %431 = vmatpush.msra.mxu0 %v414
    %432 = vmatpush.msra.mxu0 %v413
    %433 = vmatpush.msra.mxu0 %v412
    %434 = vmatpush.msra.mxu0 %v411
    %435 = vmatpush.msra.mxu0 %v410
    %436 = vmatpush.msra.mxu0 %v409
    %437 = vmatpush.msra.mxu0 %v408
    %438 = vmatpush.msra.mxu0 %v407
    %439 = vmatmul.f32.gmra.mxu0 %v406
    %v440 = vpop.f32.mrf.mxu0
    %v441 = vadd.f32 %v364, %v440
    %442 = vdwg.mxu0
    %s443 = scalar_lea.vmem [#allocation4], 128
    %v444 = vld [vmem:[%s443] sm:$0xff]
    %v445 = vld [vmem:[%s443 + $0x8] sm:$0xff]
    %v446 = vld [vmem:[%s443 + $0x10] sm:$0xff]
    %v447 = vld [vmem:[%s443 + $0x18] sm:$0xff]
    %v448 = vld [vmem:[%s443 + $0x20] sm:$0xff]
    %v449 = vld [vmem:[%s443 + $0x28] sm:$0xff]
    %v450 = vld [vmem:[%s443 + $0x30] sm:$0xff]
    %v451 = vld [vmem:[%s443 + $0x38] sm:$0xff]
    %v452 = vld [vmem:[%s443 + $0x40] sm:$0xff]
    %v453 = vld [vmem:[%s443 + $0x48] sm:$0xff]
    %v454 = vld [vmem:[%s443 + $0x50] sm:$0xff]
    %v455 = vld [vmem:[%s443 + $0x58] sm:$0xff]
    %v456 = vld [vmem:[%s443 + $0x60] sm:$0xff]
    %v457 = vld [vmem:[%s443 + $0x68] sm:$0xff]
    %v458 = vld [vmem:[%s443 + $0x70] sm:$0xff]
    %v459 = vld [vmem:[%s443 + $0x78] sm:$0xff]
    %s460 = scalar_lea.vmem %s3, 1
    %v461 = vld [vmem:[%s460] sm:$0x1]
    %v463 = vperm.slane %v461, 0
    %465 = vmatpush.msra.mxu0 %v459
    %466 = vmatpush.msra.mxu0 %v458
    %467 = vmatpush.msra.mxu0 %v457
    %468 = vmatpush.msra.mxu0 %v456
    %469 = vmatpush.msra.mxu0 %v455
    %470 = vmatpush.msra.mxu0 %v454
    %471 = vmatpush.msra.mxu0 %v453
    %472 = vmatpush.msra.mxu0 %v452
    %473 = vmatpush.msra.mxu0 %v451
    %474 = vmatpush.msra.mxu0 %v450
    %475 = vmatpush.msra.mxu0 %v449
    %476 = vmatpush.msra.mxu0 %v448
    %477 = vmatpush.msra.mxu0 %v447
    %478 = vmatpush.msra.mxu0 %v446
    %479 = vmatpush.msra.mxu0 %v445
    %480 = vmatpush.msra.mxu0 %v444
    %481 = vmatmul.f32.gmra.mxu0 %v441
    %v482 = vpop.f32.mrf.mxu0
    %v483 = vadd.f32 %v463, %v482
    %484 = vdwg.mxu0
    %v485 = vmax.f32 %v483, 0.0
    %s486 = scalar_lea.vmem [#allocation6], 128
    %v487 = vld [vmem:[%s486] sm:$0xff]
    %v488 = vld [vmem:[%s486 + $0x8] sm:$0xff]
    %v489 = vld [vmem:[%s486 + $0x10] sm:$0xff]
    %v490 = vld [vmem:[%s486 + $0x18] sm:$0xff]
    %v491 = vld [vmem:[%s486 + $0x20] sm:$0xff]
    %v492 = vld [vmem:[%s486 + $0x28] sm:$0xff]
    %v493 = vld [vmem:[%s486 + $0x30] sm:$0xff]
    %v494 = vld [vmem:[%s486 + $0x38] sm:$0xff]
    %v495 = vld [vmem:[%s486 + $0x40] sm:$0xff]
    %v496 = vld [vmem:[%s486 + $0x48] sm:$0xff]
    %v497 = vld [vmem:[%s486 + $0x50] sm:$0xff]
    %v498 = vld [vmem:[%s486 + $0x58] sm:$0xff]
    %v499 = vld [vmem:[%s486 + $0x60] sm:$0xff]
    %v500 = vld [vmem:[%s486 + $0x68] sm:$0xff]
    %v501 = vld [vmem:[%s486 + $0x70] sm:$0xff]
    %v502 = vld [vmem:[%s486 + $0x78] sm:$0xff]
    %503 = vmatpush.msra.mxu0 %v502
    %504 = vmatpush.msra.mxu0 %v501
    %505 = vmatpush.msra.mxu0 %v500
    %506 = vmatpush.msra.mxu0 %v499
    %507 = vmatpush.msra.mxu0 %v498
    %508 = vmatpush.msra.mxu0 %v497
    %509 = vmatpush.msra.mxu0 %v496
    %510 = vmatpush.msra.mxu0 %v495
    %511 = vmatpush.msra.mxu0 %v494
    %512 = vmatpush.msra.mxu0 %v493
    %513 = vmatpush.msra.mxu0 %v492
    %514 = vmatpush.msra.mxu0 %v491
    %515 = vmatpush.msra.mxu0 %v490
    %516 = vmatpush.msra.mxu0 %v489
    %517 = vmatpush.msra.mxu0 %v488
    %518 = vmatpush.msra.mxu0 %v487
    %519 = vmatmul.f32.gmra.mxu0 %v485
    %v520 = vpop.f32.mrf.mxu0
    %v521 = vadd.f32 %v441, %v520
    %522 = vdwg.mxu0
    %v523 = vld [vmem:[%s5] sm:$0xff]
    %v524 = vld [vmem:[%s5 + $0x8] sm:$0xff]
    %v525 = vld [vmem:[%s5 + $0x10] sm:$0xff]
    %v526 = vld [vmem:[%s5 + $0x18] sm:$0xff]
    %v527 = vld [vmem:[%s5 + $0x20] sm:$0xff]
    %v528 = vld [vmem:[%s5 + $0x28] sm:$0xff]
    %v529 = vld [vmem:[%s5 + $0x30] sm:$0xff]
    %v530 = vld [vmem:[%s5 + $0x38] sm:$0xff]
    %v531 = vld [vmem:[%s5 + $0x40] sm:$0xff]
    %v532 = vld [vmem:[%s5 + $0x48] sm:$0xff]
    %v533 = vld [vmem:[%s5 + $0x50] sm:$0xff]
    %v534 = vld [vmem:[%s5 + $0x58] sm:$0xff]
    %v535 = vld [vmem:[%s5 + $0x60] sm:$0xff]
    %v536 = vld [vmem:[%s5 + $0x68] sm:$0xff]
    %v537 = vld [vmem:[%s5 + $0x70] sm:$0xff]
    %v538 = vld [vmem:[%s5 + $0x78] sm:$0xff]
    %539 = vmatpush.msra.mxu0 %v538
    %540 = vmatpush.msra.mxu0 %v537
    %541 = vmatpush.msra.mxu0 %v536
    %542 = vmatpush.msra.mxu0 %v535
    %543 = vmatpush.msra.mxu0 %v534
    %544 = vmatpush.msra.mxu0 %v533
    %545 = vmatpush.msra.mxu0 %v532
    %546 = vmatpush.msra.mxu0 %v531
    %547 = vmatpush.msra.mxu0 %v530
    %548 = vmatpush.msra.mxu0 %v529
    %549 = vmatpush.msra.mxu0 %v528
    %550 = vmatpush.msra.mxu0 %v527
    %551 = vmatpush.msra.mxu0 %v526
    %552 = vmatpush.msra.mxu0 %v525
    %553 = vmatpush.msra.mxu0 %v524
    %554 = vmatpush.msra.mxu0 %v523
    %555 = vmatmul.f32.gmra.mxu0 %v521
    %v556 = vpop.f32.mrf.mxu0
    %v557 = vadd.f32 0.0, %v556
    %558 = vdwg.mxu0
    %559 = vst [vmem:[%s6] sm:$0xff] %v557
    // Predicated region
    $region38: #{mlp_forward.1} parent=1 // pred_check
      _
    $region39: #{mlp_forward.1} parent=1 // pred_check_branch
      %561 = sbr.rel (0) target = $region41
    $region40: #{mlp_forward.1} parent=1 // pred_region
      _
    $region41: #{mlp_forward.1} parent=1 // pred_fallthru
      _
    // Predicated region
    $region42: #{mlp_forward.1} parent=1 // pred_check
      _
    $region43: #{mlp_forward.1} parent=1 // pred_check_branch
      %563 = sbr.rel (0) target = $region45
    $region44: #{mlp_forward.1} parent=1 // pred_region
      _
    $region45: #{mlp_forward.1} parent=1 // pred_fallthru
      _
    %564 = vsyncpa [#allocation3], 1
    %565 = vsyncpa [#allocation5], 1

</llo_original>
